<compile_context>
chip_gen: v7x
topology: tpu7x:2x2x1
jax: 0.10.0
libtpu: 0.0.40
codegen_flags: <defaults>
</compile_context>

<pallas_src>
import math
import functools

import jax
import jax.numpy as jnp
from jax.experimental import pallas as pl
from jax.experimental.pallas import tpu as pltpu


# --------------------------- encoder pallas_call -------------------------------
def _encoder_kernel(x_ref, audio_ref, wf_ref, bf_ref, wa_ref, ba_ref,
                    x0_ref, qa0_ref):
    bblk, d_seq, f_in = x_ref.shape
    D = wf_ref.shape[1]
    xf = x_ref[...].reshape(bblk * d_seq, f_in)
    y = jnp.dot(xf.astype(wf_ref.dtype), wf_ref[...],
                preferred_element_type=jnp.float32) + bf_ref[...]
    x0_ref[...] = y.reshape(bblk, d_seq, D)
    a = audio_ref[:, 0, :]
    qa = jnp.dot(a.astype(wa_ref.dtype), wa_ref[...],
                 preferred_element_type=jnp.float32) + ba_ref[...]
    qa0_ref[...] = qa.reshape(bblk, 1, D)


# --------------------------- main fuser kernel ---------------------------------
def _fuser_kernel(mask_ref, x0_ref, qa0_ref,
                  wsa_qkv_ref, bsa_qkv_ref, wsa_o_ref, bsa_o_ref,
                  wca_q_ref, bca_q_ref, wca_kv_ref, bca_kv_ref,
                  wca_o_ref, bca_o_ref,
                  ln_ref, w1_ref, b1_ref, w2_ref, b2_ref, lnf_ref,
                  out_ref, x_scr, qa_scr, mask_scr, tri_scr, *, heads):
    """Grid point (i, l): run decoder layer l for batch block i.

    x (and the encoded audio query) live in VMEM scratch across the layer axis;
    per-layer weights are streamed (double-buffered) by the BlockSpec pipeline.
    """
    l = pl.program_id(1)
    n_layers = pl.num_programs(1)
    bblk, d_seq, D = x_scr.shape
    n = bblk * d_seq
    g = bblk * heads
    dk = D // heads
    scale = 1.0 / math.sqrt(dk)

    # per-batch validity flag (all-zero result_masks row => padded element)
    valid = jnp.sum(mask_ref[:, 0, :], axis=-1, keepdims=True) != 0.0   # (bblk,1)

    # ---- one-time per batch-block setup: load x/qa, build masks --------------
    @pl.when(l == 0)
    def _():
        x_scr[...] = x0_ref[...]
        qa_scr[...] = qa0_ref[:, 0, :]
        row = jax.lax.broadcasted_iota(jnp.int32, (d_seq, d_seq), 0)
        col = jax.lax.broadcasted_iota(jnp.int32, (d_seq, d_seq), 1)
        causal = row >= col
        tri_scr[...] = causal.astype(jnp.float32)                 # prefix matrix
        keep = jnp.logical_and(causal[None], valid[:, :, None])   # (bblk, d, d)
        mask_scr[...] = jnp.where(keep, 0.0, -1e9)                # additive mask

    def wdot(x, w, b):
        # MXU operands in the (streamed) weight dtype, f32 accumulation.
        return jnp.dot(x.astype(w.dtype), w,
                       preferred_element_type=jnp.float32) + b

    def layer_norm(x, gamma, beta):
        mu = jnp.mean(x, axis=-1, keepdims=True)
        var = jnp.mean(jnp.square(x - mu), axis=-1, keepdims=True)
        return (x - mu) * jax.lax.rsqrt(var + 1e-5) * gamma + beta

    def split_heads(t2d):   # (n, D) -> (bblk, heads, d_seq, dk)
        return t2d.reshape(bblk, d_seq, heads, dk).transpose(0, 2, 1, 3)

    def merge_heads(t4d):   # (bblk, heads, d_seq, dk) -> (bblk, d_seq, D)
        return t4d.transpose(0, 2, 1, 3).reshape(bblk, d_seq, D)

    xf = x_scr[...].reshape(n, D)        # resident activations (f32)
    qa = qa_scr[...]                     # (bblk, D)
    amask = mask_scr[...]                # (bblk, d_seq, d_seq) additive 0/-1e9
    tri = tri_scr[...]                   # (d_seq, d_seq) lower-triangular ones
    ln = ln_ref[0]                       # (3, 2, D): this layer's LN params

    # ------------- self-attention sublayer (pre-LN + residual) ----------------
    xn = layer_norm(xf, ln[0, 0], ln[0, 1])
    qkv = wdot(xn, wsa_qkv_ref[0], bsa_qkv_ref[0, 0])             # (n, 3D)
    qh = split_heads(qkv[:, :D]).reshape(g, d_seq, dk)
    kh = split_heads(qkv[:, D:2 * D]).reshape(g, d_seq, dk)
    vh = split_heads(qkv[:, 2 * D:]).reshape(g, d_seq, dk)
    s = jnp.einsum('gqe,gke->gqk', qh, kh,
                   preferred_element_type=jnp.float32)            # (g, d, d)
    s = s.reshape(bblk, heads, d_seq, d_seq) * scale + amask[:, None]
    s = s - jnp.max(s, axis=-1, keepdims=True)
    e = jnp.exp(s)
    p = e * pl.reciprocal(jnp.sum(e, axis=-1, keepdims=True), approx=True)
    o = jnp.einsum('gqk,gke->gqe', p.reshape(g, d_seq, d_seq), vh,
                   preferred_element_type=jnp.float32)            # (g, d, dk)
    o = merge_heads(o.reshape(bblk, heads, d_seq, dk))            # (bblk, d, D)
    # masked_fill semantics of the reference: a fully padded batch element
    # attends uniformly over all positions.
    v_all = qkv[:, 2 * D:].reshape(bblk, d_seq, D)
    o = jnp.where(valid[:, :, None], o, jnp.mean(v_all, axis=1, keepdims=True))
    xf = xf + wdot(o.reshape(n, D), wsa_o_ref[0], bsa_o_ref[0, 0])

    # ---- cross-attention with the single audio query (rank-1 scores) ---------
    q_a = wdot(qa, wca_q_ref[0], bca_q_ref[0, 0]).reshape(g, 1, dk)
    kv = wdot(xf, wca_kv_ref[0], bca_kv_ref[0, 0])                # (n, 2D)
    k2 = split_heads(kv[:, :D]).reshape(g, d_seq, dk)
    v2 = split_heads(kv[:, D:]).reshape(g, d_seq, dk)
    s2 = jnp.einsum('gqe,gke->gqk', q_a, k2,
                    preferred_element_type=jnp.float32) * scale   # (g, 1, d)
    e2 = jnp.exp(s2 - jnp.max(s2, axis=-1, keepdims=True))        # (g, 1, d)
    # causal row i attends keys j <= i: prefix sums via lower-triangular matmul
    denom = jnp.einsum('ij,gqj->gqi', tri, e2,
                       preferred_element_type=jnp.float32)        # (g, 1, d)
    ev = e2[:, 0, :, None] * v2                                   # (g, d, dk)
    num = jnp.einsum('ij,gje->gie', tri, ev,
                     preferred_element_type=jnp.float32)          # (g, d, dk)
    denom_t = jnp.maximum(denom[:, 0, :, None], 1e-30)            # underflow guard
    o2 = num * pl.reciprocal(denom_t, approx=True)
    o2 = merge_heads(o2.reshape(bblk, heads, d_seq, dk))          # (bblk, d, D)
    v2_all = kv[:, D:].reshape(bblk, d_seq, D)
    o2 = jnp.where(valid[:, :, None], o2,
                   jnp.mean(v2_all, axis=1, keepdims=True))
    xf = xf + wdot(o2.reshape(n, D), wca_o_ref[0], bca_o_ref[0, 0])

    # -------- DecoderLayer.layer_norm + PositionwiseFeedForward sublayer ------
    xf = layer_norm(xf, ln[2, 0], ln[2, 1])
    xn2 = layer_norm(xf, ln[1, 0], ln[1, 1])
    h = jnp.maximum(wdot(xn2, w1_ref[0], b1_ref[0, 0]), 0.0)      # relu(w_1 x)
    xf = xf + wdot(h, w2_ref[0], b2_ref[0, 0])                    # w_2(.), dropout=id

    x_scr[...] = xf.reshape(bblk, d_seq, D)

    # ----------------- final LayerNorm + direct writeback ---------------------
    @pl.when(l == n_layers - 1)
    def _():
        lnf = lnf_ref[...]
        y = layer_norm(xf, lnf[0:1, :], lnf[1:2, :])
        out_ref[...] = y.reshape(bblk, d_seq, D)


# ------------------------------ wrapper ----------------------------------------
def _pick_vmem_limit():
    try:
        cap = pltpu.get_tpu_info().vmem_capacity_bytes
        return min(int(cap * 0.85), 110 * 1024 * 1024)
    except Exception:
        return 48 * 1024 * 1024


def transformer_fuser(inputs, result_masks, result_audio, params, *, heads,
                      weight_dtype=jnp.bfloat16, batch_block=None):
    B, d_seq, f_in = inputs.shape
    D = params['wf'].shape[1]
    H = params['w1'].shape[2]
    L = params['wsa'].shape[0]

    # Fold enough batch elements into one grid step to fill MXU rows and
    # amortize the per-layer weight stream (target ~256 rows; must divide B).
    # NOTE: on v7x keep B // batch_block >= 2 when possible so both TCs get work.
    if batch_block is None:
        cap = max(1, 256 // max(d_seq, 1))
        batch_block = 1
        for cand in range(1, B + 1):
            if B % cand == 0 and cand <= cap:
                batch_block = cand
    nb = B // batch_block

    wd = lambda a: a.astype(weight_dtype)   # streamed weight matrices only
    wsa, bsa = params['wsa'], params['bsa']
    wca, bca = params['wca'], params['bca']
    # Fused full-width projection weights (review item: undo per-head split).
    wsa_qkv = wd(jnp.concatenate([wsa[:, 0], wsa[:, 1], wsa[:, 2]], axis=-1))
    bsa_qkv = jnp.concatenate([bsa[:, 0], bsa[:, 1], bsa[:, 2]], axis=-1)
    wsa_o, bsa_o = wd(wsa[:, 3]), bsa[:, 3]
    wca_q, bca_q = wd(wca[:, 0]), bca[:, 0]
    wca_kv = wd(jnp.concatenate([wca[:, 1], wca[:, 2]], axis=-1))
    bca_kv = jnp.concatenate([bca[:, 1], bca[:, 2]], axis=-1)
    wca_o, bca_o = wd(wca[:, 3]), bca[:, 3]
    w1c, w2c = wd(params['w1']), wd(params['w2'])

    masks3 = result_masks.reshape(B, 1, d_seq)
    audio3 = result_audio.reshape(B, 1, D)
    vmem_limit = _pick_vmem_limit()

    # ---- one-shot encoders: separate small pallas_call (keeps the layer-loop
    # kernel's VMEM free for streamed per-layer weights) -----------------------
    x0, qa0 = pl.pallas_call(
        _encoder_kernel,
        out_shape=(jax.ShapeDtypeStruct((B, d_seq, D), jnp.float32),
                   jax.ShapeDtypeStruct((B, 1, D), jnp.float32)),
        grid=(nb,),
        in_specs=[pl.BlockSpec((batch_block, d_seq, f_in), lambda i: (i, 0, 0)),
                  pl.BlockSpec((batch_block, 1, D), lambda i: (i, 0, 0)),
                  pl.BlockSpec((f_in, D), lambda i: (0, 0)),
                  pl.BlockSpec((1, D), lambda i: (0, 0)),
                  pl.BlockSpec((D, D), lambda i: (0, 0)),
                  pl.BlockSpec((1, D), lambda i: (0, 0))],
        out_specs=(pl.BlockSpec((batch_block, d_seq, D), lambda i: (i, 0, 0)),
                   pl.BlockSpec((batch_block, 1, D), lambda i: (i, 0, 0))),
        compiler_params=pltpu.CompilerParams(
            dimension_semantics=("parallel",)),
    )(inputs, audio3, wd(params['wf']), params['bf'],
      wd(params['wa']), params['ba'])

    kernel = functools.partial(_fuser_kernel, heads=heads)

    def batch_spec(*shape):
        return pl.BlockSpec(shape, lambda i, l: (i,) + (0,) * (len(shape) - 1))

    def layer_spec(*shape):
        return pl.BlockSpec(shape, lambda i, l: (l,) + (0,) * (len(shape) - 1))

    def const_spec(*shape):
        return pl.BlockSpec(shape, lambda i, l: (0,) * len(shape))

    in_specs = [
        batch_spec(batch_block, 1, d_seq),                       # result_masks
        batch_spec(batch_block, d_seq, D),                       # encoded x0
        batch_spec(batch_block, 1, D),                           # encoded audio q
        layer_spec(1, D, 3 * D), layer_spec(1, 1, 3 * D),        # self-attn QKV
        layer_spec(1, D, D), layer_spec(1, 1, D),                # self-attn out
        layer_spec(1, D, D), layer_spec(1, 1, D),                # cross-attn Q
        layer_spec(1, D, 2 * D), layer_spec(1, 1, 2 * D),        # cross-attn KV
        layer_spec(1, D, D), layer_spec(1, 1, D),                # cross-attn out
        layer_spec(1, 3, 2, D),                                  # per-layer LNs
        layer_spec(1, D, H), layer_spec(1, 1, H),                # FFN w1
        layer_spec(1, H, D), layer_spec(1, 1, D),                # FFN w2
        const_spec(2, D),                                        # final LN
    ]

    out = pl.pallas_call(
        kernel,
        out_shape=jax.ShapeDtypeStruct((B, d_seq, D), jnp.float32),
        grid=(nb, L),
        in_specs=in_specs,
        out_specs=pl.BlockSpec((batch_block, d_seq, D), lambda i, l: (i, 0, 0)),
        scratch_shapes=[pltpu.VMEM((batch_block, d_seq, D), jnp.float32),  # x
                        pltpu.VMEM((batch_block, D), jnp.float32),         # audio q
                        pltpu.VMEM((batch_block, d_seq, d_seq), jnp.float32),
                        pltpu.VMEM((d_seq, d_seq), jnp.float32)],
        compiler_params=pltpu.CompilerParams(
            dimension_semantics=("parallel", "arbitrary"),
            vmem_limit_bytes=vmem_limit),
    )(masks3, x0, qa0,
      wsa_qkv, bsa_qkv, wsa_o, bsa_o,
      wca_q, bca_q, wca_kv, bca_kv, wca_o, bca_o,
      params['ln'], w1c, params['b1'], w2c, params['b2'], params['lnf'])
    return out


# ------------------------- pure-JAX reference -----------------------------------
def _layer_norm_ref(x, g, b, eps=1e-5):
    mu = jnp.mean(x, axis=-1, keepdims=True)
    var = jnp.mean(jnp.square(x - mu), axis=-1, keepdims=True)
    return (x - mu) / jnp.sqrt(var + eps) * g + b


def _mha_ref(q_in, kv_in, w, bias, mask, heads):
    D = q_in.shape[-1]
    dk = D // heads
    q = q_in @ w[0] + bias[0]
    k = kv_in @ w[1] + bias[1]
    v = kv_in @ w[2] + bias[2]

    def split(t):
        bsz, n, _ = t.shape
        return t.reshape(bsz, n, heads, dk).transpose(0, 2, 1, 3)

    qh, kh, vh = split(q), split(k), split(v)
    s = jnp.einsum('bhqe,bhke->bhqk', qh, kh) / math.sqrt(dk)
    d_seq = mask.shape[1]
    s = jnp.broadcast_to(s, (s.shape[0], s.shape[1], d_seq, s.shape[3]))
    s = jnp.where(mask[:, None], s, -1e9)
    p = jax.nn.softmax(s, axis=-1)
    o = jnp.einsum('bhqk,bhke->bhqe', p, vh)
    o = o.transpose(0, 2, 1, 3).reshape(o.shape[0], -1, D)
    return o @ w[3] + bias[3]


def transformer_fuser_ref(inputs, result_masks, result_audio, p, *, heads):
    b, d_seq, _ = inputs.shape
    x = inputs @ p['wf'] + p['bf']
    qa = (result_audio @ p['wa'] + p['ba'])[:, None, :]
    valid = jnp.sum(result_masks, axis=-1) != 0
    causal = jnp.arange(d_seq)[:, None] >= jnp.arange(d_seq)[None, :]
    mask = causal[None] & valid[:, None, None]
    for l in range(p['wsa'].shape[0]):
        xn = _layer_norm_ref(x, p['ln'][l, 0, 0], p['ln'][l, 0, 1])
        x = x + _mha_ref(xn, xn, p['wsa'][l], p['bsa'][l], mask, heads)
        x = x + _mha_ref(qa, x, p['wca'][l], p['bca'][l], mask, heads)
        x = _layer_norm_ref(x, p['ln'][l, 2, 0], p['ln'][l, 2, 1])
        xn2 = _layer_norm_ref(x, p['ln'][l, 1, 0], p['ln'][l, 1, 1])
        h = jnp.maximum(xn2 @ p['w1'][l] + p['b1'][l], 0.0)
        x = x + (h @ p['w2'][l] + p['b2'][l])
    return _layer_norm_ref(x, p['lnf'][0], p['lnf'][1])


# ------------------------------- main -------------------------------------------
if __name__ == "__main__":
    B, D_SEQ, BERT, HEADS, HIDDEN, N_LAYERS = 2, 8, 32, 4, 64, 2
    F_IN = BERT + 14

    key = jax.random.PRNGKey(0)
    kp = jax.random.split(key, 16)
    w = lambda k, *s: (0.08 * jax.random.normal(k, s)).astype(jnp.float32)

    params = {
        'wf': w(kp[0], F_IN, BERT), 'bf': w(kp[1], 1, BERT),
        'wa': w(kp[2], BERT, BERT), 'ba': w(kp[3], 1, BERT),
        'wsa': w(kp[4], N_LAYERS, 4, BERT, BERT),
        'bsa': w(kp[5], N_LAYERS, 4, 1, BERT),
        'wca': w(kp[6], N_LAYERS, 4, BERT, BERT),
        'bca': w(kp[7], N_LAYERS, 4, 1, BERT),
        # ln[l, n, 0] = gamma, ln[l, n, 1] = beta;  n: 0=sublayer0, 1=sublayer1, 2=layer_norm
        'ln': jnp.stack([1.0 + 0.05 * jax.random.normal(kp[8], (N_LAYERS, 3, BERT)),
                         0.05 * jax.random.normal(kp[9], (N_LAYERS, 3, BERT))],
                        axis=2).astype(jnp.float32),
        'w1': w(kp[10], N_LAYERS, BERT, HIDDEN), 'b1': w(kp[11], N_LAYERS, 1, HIDDEN),
        'w2': w(kp[12], N_LAYERS, HIDDEN, BERT), 'b2': w(kp[13], N_LAYERS, 1, BERT),
        'lnf': jnp.stack([1.0 + 0.05 * jax.random.normal(kp[14], (BERT,)),
                          0.05 * jax.random.normal(kp[15], (BERT,))],
                         axis=0).astype(jnp.float32),
    }

    kd = jax.random.split(jax.random.PRNGKey(1), 3)
    inputs = jax.random.normal(kd[0], (B, D_SEQ, F_IN), jnp.float32)
    result_masks = (jax.random.uniform(kd[1], (B, D_SEQ)) > 0.3).astype(jnp.float32)
    result_audio = jax.random.normal(kd[2], (B, BERT), jnp.float32)

    ref = transformer_fuser_ref(inputs, result_masks, result_audio, params,
                                heads=HEADS)

    # f32 weight streaming: bit-accuracy check against the reference.
    out32 = transformer_fuser(inputs, result_masks, result_audio, params,
                              heads=HEADS, weight_dtype=jnp.float32)
    out32 = jax.block_until_ready(out32)
    assert out32.shape == (B, D_SEQ, BERT)
    err32 = float(jnp.max(jnp.abs(out32 - ref)))
    assert err32 < 1e-2, f"f32 mismatch vs reference: max abs err = {err32}"

    # bf16 weight streaming (production path): looser precision bound only.
    out16 = transformer_fuser(inputs, result_masks, result_audio, params,
                              heads=HEADS, weight_dtype=jnp.bfloat16)
    out16 = jax.block_until_ready(out16)
    err16 = float(jnp.max(jnp.abs(out16 - ref)))
    assert err16 < 1e-1, f"bf16 mismatch vs reference: max abs err = {err16}"

    print("KERNEL_OK")
</pallas_src>

<mosaic_0001>
module attributes {stable_mosaic.version = 11 : i64} {
  func.func @_encoder_kernel(%arg0: i32, %arg1: memref<2x8x46xf32, #tpu.memory_space<vmem>>, %arg2: memref<2x1x32xf32, #tpu.memory_space<vmem>>, %arg3: memref<46x32xf32, #tpu.memory_space<vmem>>, %arg4: memref<1x32xf32, #tpu.memory_space<vmem>>, %arg5: memref<32x32xf32, #tpu.memory_space<vmem>>, %arg6: memref<1x32xf32, #tpu.memory_space<vmem>>, %arg7: memref<2x8x32xf32, #tpu.memory_space<vmem>>, %arg8: memref<2x1x32xf32, #tpu.memory_space<vmem>>) attributes {dimension_semantics = [#tpu.dimension_semantics<parallel>], iteration_bounds = array<i64: 1>, scalar_prefetch = 0 : i64, scratch_operands = 0 : i64, tpu.core_type = #tpu.core_type<tc>, window_params = [{transform_indices = @transform_0, window_bounds = array<i64: 2, 8, 46>}, {transform_indices = @transform_1, window_bounds = array<i64: 2, 1, 32>}, {pipeline_mode = #tpu.pipeline_mode<synchronous>, transform_indices = @transform_2, window_bounds = array<i64: 46, 32>}, {pipeline_mode = #tpu.pipeline_mode<synchronous>, transform_indices = @transform_3, window_bounds = array<i64: 1, 32>}, {pipeline_mode = #tpu.pipeline_mode<synchronous>, transform_indices = @transform_4, window_bounds = array<i64: 32, 32>}, {pipeline_mode = #tpu.pipeline_mode<synchronous>, transform_indices = @transform_5, window_bounds = array<i64: 1, 32>}, {transform_indices = @transform_6, window_bounds = array<i64: 2, 8, 32>}, {transform_indices = @transform_7, window_bounds = array<i64: 2, 1, 32>}]} {
    %c0 = arith.constant 0 : index
    %c0_0 = arith.constant 0 : index
    %c0_1 = arith.constant 0 : index
    %0 = vector.load %arg1[%c0, %c0_0, %c0_1] : memref<2x8x46xf32, #tpu.memory_space<vmem>>, vector<2x8x46xf32>
    %1 = vector.shape_cast %0 : vector<2x8x46xf32> to vector<16x46xf32>
    %c0_2 = arith.constant 0 : index
    %c0_3 = arith.constant 0 : index
    %2 = vector.load %arg3[%c0_2, %c0_3] : memref<46x32xf32, #tpu.memory_space<vmem>>, vector<46x32xf32>
    %cst = arith.constant dense<0.000000e+00> : vector<16x32xf32>
    %3 = tpu.matmul %1, %2, %cst {dimension_numbers = #tpu.dot_dimension_numbers<[1], [0], [0], [1], [0, 0, 1, 1], [], []>} : vector<16x46xf32>, vector<46x32xf32>, vector<16x32xf32> -> vector<16x32xf32>
    %c0_4 = arith.constant 0 : index
    %c0_5 = arith.constant 0 : index
    %4 = vector.load %arg4[%c0_4, %c0_5] : memref<1x32xf32, #tpu.memory_space<vmem>>, vector<1x32xf32>
    %5 = vector.broadcast %4 : vector<1x32xf32> to vector<16x32xf32>
    %6 = arith.addf %3, %5 : vector<16x32xf32>
    %7 = vector.shape_cast %6 : vector<16x32xf32> to vector<2x8x32xf32>
    %c0_6 = arith.constant 0 : index
    %c0_7 = arith.constant 0 : index
    %c0_8 = arith.constant 0 : index
    %8 = vector.load %arg7[%c0_6, %c0_7, %c0_8] : memref<2x8x32xf32, #tpu.memory_space<vmem>>, vector<2x8x32xf32>
    tpu.vector_store %arg7[%c0_6, %c0_7, %c0_8], %7 {strides = array<i32>} : memref<2x8x32xf32, #tpu.memory_space<vmem>>, vector<2x8x32xf32>,
    %c0_9 = arith.constant 0 : index
    %c0_10 = arith.constant 0 : index
    %c0_11 = arith.constant 0 : index
    %9 = vector.load %arg2[%c0_9, %c0_10, %c0_11] : memref<2x1x32xf32, #tpu.memory_space<vmem>>, vector<2x1x32xf32>
    %10 = vector.shape_cast %9 : vector<2x1x32xf32> to vector<2x32xf32>
    %c0_12 = arith.constant 0 : index
    %c0_13 = arith.constant 0 : index
    %11 = vector.load %arg5[%c0_12, %c0_13] : memref<32x32xf32, #tpu.memory_space<vmem>>, vector<32x32xf32>
    %cst_14 = arith.constant dense<0.000000e+00> : vector<2x32xf32>
    %12 = tpu.matmul %10, %11, %cst_14 {dimension_numbers = #tpu.dot_dimension_numbers<[1], [0], [0], [1], [0, 0, 1, 1], [], []>} : vector<2x32xf32>, vector<32x32xf32>, vector<2x32xf32> -> vector<2x32xf32>
    %c0_15 = arith.constant 0 : index
    %c0_16 = arith.constant 0 : index
    %13 = vector.load %arg6[%c0_15, %c0_16] : memref<1x32xf32, #tpu.memory_space<vmem>>, vector<1x32xf32>
    %14 = vector.broadcast %13 : vector<1x32xf32> to vector<2x32xf32>
    %15 = arith.addf %12, %14 : vector<2x32xf32>
    %16 = vector.shape_cast %15 : vector<2x32xf32> to vector<2x1x32xf32>
    %c0_17 = arith.constant 0 : index
    %c0_18 = arith.constant 0 : index
    %c0_19 = arith.constant 0 : index
    %17 = vector.load %arg8[%c0_17, %c0_18, %c0_19] : memref<2x1x32xf32, #tpu.memory_space<vmem>>, vector<2x1x32xf32>
    tpu.vector_store %arg8[%c0_17, %c0_18, %c0_19], %16 {strides = array<i32>} : memref<2x1x32xf32, #tpu.memory_space<vmem>>, vector<2x1x32xf32>,
    return
  }
  func.func @transform_0(%arg0: i32) -> (i32, i32, i32) {
    %c0_i32 = arith.constant 0 : i32
    %c0_i32_0 = arith.constant 0 : i32
    %c0_i32_1 = arith.constant 0 : i32
    return %arg0, %c0_i32, %c0_i32_0 : i32, i32, i32
  }
  func.func @transform_1(%arg0: i32) -> (i32, i32, i32) {
    %c0_i32 = arith.constant 0 : i32
    %c0_i32_0 = arith.constant 0 : i32
    %c0_i32_1 = arith.constant 0 : i32
    return %arg0, %c0_i32, %c0_i32_0 : i32, i32, i32
  }
  func.func @transform_2(%arg0: i32) -> (i32, i32) {
    %c0_i32 = arith.constant 0 : i32
    %c0_i32_0 = arith.constant 0 : i32
    %c0_i32_1 = arith.constant 0 : i32
    return %c0_i32, %c0_i32_0 : i32, i32
  }
  func.func @transform_3(%arg0: i32) -> (i32, i32) {
    %c0_i32 = arith.constant 0 : i32
    %c0_i32_0 = arith.constant 0 : i32
    %c0_i32_1 = arith.constant 0 : i32
    return %c0_i32, %c0_i32_0 : i32, i32
  }
  func.func @transform_4(%arg0: i32) -> (i32, i32) {
    %c0_i32 = arith.constant 0 : i32
    %c0_i32_0 = arith.constant 0 : i32
    %c0_i32_1 = arith.constant 0 : i32
    return %c0_i32, %c0_i32_0 : i32, i32
  }
  func.func @transform_5(%arg0: i32) -> (i32, i32) {
    %c0_i32 = arith.constant 0 : i32
    %c0_i32_0 = arith.constant 0 : i32
    %c0_i32_1 = arith.constant 0 : i32
    return %c0_i32, %c0_i32_0 : i32, i32
  }
  func.func @transform_6(%arg0: i32) -> (i32, i32, i32) {
    %c0_i32 = arith.constant 0 : i32
    %c0_i32_0 = arith.constant 0 : i32
    %c0_i32_1 = arith.constant 0 : i32
    return %arg0, %c0_i32, %c0_i32_0 : i32, i32, i32
  }
  func.func @transform_7(%arg0: i32) -> (i32, i32, i32) {
    %c0_i32 = arith.constant 0 : i32
    %c0_i32_0 = arith.constant 0 : i32
    %c0_i32_1 = arith.constant 0 : i32
    return %arg0, %c0_i32, %c0_i32_0 : i32, i32, i32
  }
}

</mosaic_0001>

<llo_original>
// kernel: tpu_custom_call.1
$region0: #{tpu_custom_call.1}
  #allocation0 [shape = 'u32[]', space=smem, size = 0x4, offset = 0x4, fixed_abs, tag = 'smem constant byte address 0x4 - core index']
  #allocation1 [shape = 'u32[144,128]{1,0:T(1,128)}', space=vmem, size = 0x12000, scoped, tag = 'internal scratch']
  %s0 = inlined_call_operand.vmem [shape: f32[2,8,46], index: 0, kind: input, shape index: {}]
  %s1 = inlined_call_operand.vmem [shape: f32[2,1,32], index: 1, kind: input, shape index: {}]
  %s2 = inlined_call_operand.vmem [shape: f32[46,32], index: 2, kind: input, shape index: {}]
  %s3 = inlined_call_operand.vmem [shape: f32[1,32], index: 3, kind: input, shape index: {}]
  %s4 = inlined_call_operand.vmem [shape: f32[32,32], index: 4, kind: input, shape index: {}]
  %s5 = inlined_call_operand.vmem [shape: f32[1,32], index: 5, kind: input, shape index: {}]
  %s6 = inlined_call_operand.hbm [shape: f32[2,8,32], index: 6, kind: output, shape index: {0}]
  %s7 = inlined_call_operand.hbm [shape: f32[2,1,32], index: 7, kind: output, shape index: {1}]
  %8 = xla_tuple %s6, %s7
  %s9 = sld [smem:[#allocation0]]
  $region42: #{tpu_custom_call.1} parent=0
    _
  %s11 = ssub.s32 1, %s9
  %s12 = scalar_select 0, %s11, %s9
  $region1: #{tpu_custom_call.1} parent=0
    #allocation2 [shape = 'u8[8192]{0}', space=vmem, size = 0x2000, scoped, tag = 'output window, operand 0, single buffered']
    #allocation3 [shape = 's32[1]{0}', space=sflag, size = 0x4, scoped, tag = 'scoped memory for tpu_custom_call.1']
    #allocation4 [shape = 'u8[1024]{0}', space=vmem, size = 0x400, scoped, tag = 'output window, operand 1, single buffered']
    #allocation5 [shape = 's32[1]{0}', space=sflag, size = 0x4, scoped, tag = 'scoped memory for tpu_custom_call.1']
    %13 = vsyncpa [#allocation3], 0
    %14 = vsyncpa [#allocation5], 0
    // Predicated region
    $region2: #{tpu_custom_call.1} parent=1 // pred_check
      _
    $region3: #{tpu_custom_call.1} parent=1 // pred_check_branch
      %16 = sbr.rel (0) target = $region5
    $region4: #{tpu_custom_call.1} parent=1 // pred_region
      _
    $region5: #{tpu_custom_call.1} parent=1 // pred_fallthru
      _
    // Predicated region
    $region6: #{tpu_custom_call.1} parent=1 // pred_check
      _
    $region7: #{tpu_custom_call.1} parent=1 // pred_check_branch
      %18 = sbr.rel (0) target = $region9
    $region8: #{tpu_custom_call.1} parent=1 // pred_region
      _
    $region9: #{tpu_custom_call.1} parent=1 // pred_fallthru
      _
    // Predicated region
    $region10: #{tpu_custom_call.1} parent=1 // pred_check
      _
    $region11: #{tpu_custom_call.1} parent=1 // pred_check_branch
      %20 = sbr.rel (0) target = $region13
    $region12: #{tpu_custom_call.1} parent=1 // pred_region
      _
    $region13: #{tpu_custom_call.1} parent=1 // pred_fallthru
      _
    // Predicated region
    $region14: #{tpu_custom_call.1} parent=1 // pred_check
      _
    $region15: #{tpu_custom_call.1} parent=1 // pred_check_branch
      %22 = sbr.rel (0) target = $region17
    $region16: #{tpu_custom_call.1} parent=1 // pred_region
      _
    $region17: #{tpu_custom_call.1} parent=1 // pred_fallthru
      _
    // Predicated region
    $region18: #{tpu_custom_call.1} parent=1 // pred_check
      _
    $region19: #{tpu_custom_call.1} parent=1 // pred_check_branch
      %24 = sbr.rel (0) target = $region21
    $region20: #{tpu_custom_call.1} parent=1 // pred_region
      _
    $region21: #{tpu_custom_call.1} parent=1 // pred_fallthru
      _
    // Predicated region
    $region22: #{tpu_custom_call.1} parent=1 // pred_check
      _
    $region23: #{tpu_custom_call.1} parent=1 // pred_check_branch
      %26 = sbr.rel (0) target = $region25
    $region24: #{tpu_custom_call.1} parent=1 // pred_region
      _
    $region25: #{tpu_custom_call.1} parent=1 // pred_fallthru
      _
    %v27 = vld [vmem:[%s0] sm:$0xff]
    %v28 = vld [vmem:[%s0 + $0x8] sm:$0xff]
    %v29 = vld [vmem:[%s2] sm:$0xff]
    %v30 = vld [vmem:[%s2 + $0x8] sm:$0xff]
    %v31 = vld [vmem:[%s2 + $0x10] sm:$0xff]
    %v32 = vld [vmem:[%s2 + $0x18] sm:$0xff]
    %v33 = vld [vmem:[%s2 + $0x20] sm:$0xff]
    %v34 = vld [vmem:[%s2 + $0x28] sm:$0x3f]
    %v35 = vld [vmem:[%s3] sm:$0x1]
    %v37 = vlaneseq
    %v38 = vshrl.u32 %v37, 7
    %v39 = vsub.s32 0, %v38
    %v40 = vrot.slane %v35, %v39
    %vm42 = vcmask 375808
    %v44 = vsel %vm42, %v27, 0
    %v47 = vsel %vm42, %v28, 0
    %vm49 = vcmask 1045504
    %v51 = vsel %vm49, %v34, 0
    %53 = vmatprep.subr.mxu0 0.0
    %54 = vmatpush1.msra.mxu0 %v29
    %55 = vmatprep.subr.mxu0 0.0
    %56 = vmatpush1.msra.mxu0 %v30
    %57 = vmatprep.subr.mxu0 0.0
    %58 = vmatpush1.msra.mxu0 %v31
    %59 = vmatprep.subr.mxu0 0.0
    %60 = vmatpush1.msra.mxu0 %v32
    %61 = vmatprep.subr.mxu0 0.0
    %62 = vmatpush1.msra.mxu0 %v33
    %63 = vmatprep.subr.mxu0 0.0
    %64 = vmatpush1.msra.mxu0 %v51
    %65 = vmatprep.subr.mxu0 0.0
    %66 = vmatpush1.msra.mxu0 0.0
    %67 = vmatprep.subr.mxu0 0.0
    %68 = vmatpush1.msra.mxu0 0.0
    %69 = vmatprep.subr.mxu0 0.0
    %70 = vmatpush1.msra.mxu0 0.0
    %71 = vmatprep.subr.mxu0 0.0
    %72 = vmatpush1.msra.mxu0 0.0
    %73 = vmatprep.subr.mxu0 0.0
    %74 = vmatpush1.msra.mxu0 0.0
    %75 = vmatprep.subr.mxu0 0.0
    %76 = vmatpush1.msra.mxu0 0.0
    %77 = vmatprep.subr.mxu0 0.0
    %78 = vmatpush1.msra.mxu0 0.0
    %79 = vmatprep.subr.mxu0 0.0
    %80 = vmatpush1.msra.mxu0 0.0
    %81 = vmatprep.subr.mxu0 0.0
    %82 = vmatpush1.msra.mxu0 0.0
    %83 = vmatprep.subr.mxu0 0.0
    %84 = vmatpush1.msra.mxu0 0.0
    %85 = vmatprep.subr.mxu0 0.0
    %86 = vmatpush1.msra.mxu0 0.0
    %87 = vmatprep.subr.mxu0 0.0
    %88 = vmatpush1.msra.mxu0 0.0
    %89 = vmatprep.subr.mxu0 0.0
    %90 = vmatpush1.msra.mxu0 0.0
    %91 = vmatprep.subr.mxu0 0.0
    %92 = vmatpush1.msra.mxu0 0.0
    %93 = vmatprep.subr.mxu0 0.0
    %94 = vmatpush1.msra.mxu0 0.0
    %95 = vmatprep.subr.mxu0 0.0
    %96 = vmatpush1.msra.mxu0 0.0
    %97 = vmatprep.subr.mxu0 0.0
    %98 = vmatpush1.msra.mxu0 0.0
    %99 = vmatprep.subr.mxu0 0.0
    %100 = vmatpush1.msra.mxu0 0.0
    %101 = vmatprep.subr.mxu0 0.0
    %102 = vmatpush1.msra.mxu0 0.0
    %103 = vmatprep.subr.mxu0 0.0
    %104 = vmatpush1.msra.mxu0 0.0
    %105 = vmatprep.subr.mxu0 0.0
    %106 = vmatpush1.msra.mxu0 0.0
    %107 = vmatprep.subr.mxu0 0.0
    %108 = vmatpush1.msra.mxu0 0.0
    %109 = vmatprep.subr.mxu0 0.0
    %110 = vmatpush1.msra.mxu0 0.0
    %111 = vmatprep.subr.mxu0 0.0
    %112 = vmatpush1.msra.mxu0 0.0
    %113 = vmatprep.subr.mxu0 0.0
    %114 = vmatpush1.msra.mxu0 0.0
    %115 = vmatprep.subr.mxu0 0.0
    %116 = vmatpush1.msra.mxu0 0.0
    %117 = vmatprep.mubr.f32.mxu0 0.0
    %118 = vmatmul.mubr.f32.gmra.mrb[0].mxu0 %v44
    %v119 = vpop.f32.mrb[0].mxu0
    %v120 = vadd.f32 %v40, %v119
    %v121 = vpop.f32.mrb[0].mxu0
    %122 = vmatprep.mubr.f32.mxu0 0.0
    %123 = vmatmul.mubr.f32.gmra.mrb[0].mxu0 %v47
    %v124 = vpop.f32.mrb[0].mxu0
    %v125 = vadd.f32 %v40, %v124
    %v126 = vpop.f32.mrb[0].mxu0
    %127 = vdwg.mxu0
    %vm128 = vcmask 261120
    %129 = vst.msk [vmem:[#allocation2] sm:$0xff] %vm128, %v120
    %130 = vst.msk [vmem:[#allocation2 + $0x8] sm:$0xff] %vm128, %v125
    %v131 = vld [vmem:[%s1] sm:$0x1]
    %v132 = vld [vmem:[%s1 + $0x1] sm:$0x1]
    %v133 = vld [vmem:[%s4] sm:$0xff]
    %v134 = vld [vmem:[%s4 + $0x8] sm:$0xff]
    %v135 = vld [vmem:[%s4 + $0x10] sm:$0xff]
    %v136 = vld [vmem:[%s4 + $0x18] sm:$0xff]
    %v137 = vld [vmem:[%s5] sm:$0x1]
    %v139 = vlaneseq
    %v140 = vshrl.u32 %v139, 7
    %v141 = vsub.s32 0, %v140
    %v142 = vrot.slane %v137, %v141
    %v146 = vcombine.low %v131, %v132
    %v148 = vunpack.c.l.s4 1966171168
    %v149 = vunpack.c.0.s8 %v148
    %v150 = vlaneseq
    %v151 = vshrl.u32 %v150, 7
    %v152 = vsub.s32 %v149, %v151
    %v153 = vrot.slane %v146, %v152
    %v155 = vunpack.c.l.s4 1966171168
    %v156 = vunpack.c.0.s8 %v155
    %v157 = vlaneseq
    %v158 = vshrl.u32 %v157, 7
    %v159 = vsub.s32 %v156, %v158
    %v160 = vrot.slane %v153, %v159
    %v161 = vsel %vm128, %v160, 0
    %163 = vmatprep.subr.mxu0 0.0
    %164 = vmatpush1.msra.mxu0 %v133
    %165 = vmatprep.subr.mxu0 0.0
    %166 = vmatpush1.msra.mxu0 %v134
    %167 = vmatprep.subr.mxu0 0.0
    %168 = vmatpush1.msra.mxu0 %v135
    %169 = vmatprep.subr.mxu0 0.0
    %170 = vmatpush1.msra.mxu0 %v136
    %171 = vmatprep.subr.mxu0 0.0
    %172 = vmatpush1.msra.mxu0 0.0
    %173 = vmatprep.subr.mxu0 0.0
    %174 = vmatpush1.msra.mxu0 0.0
    %175 = vmatprep.subr.mxu0 0.0
    %176 = vmatpush1.msra.mxu0 0.0
    %177 = vmatprep.subr.mxu0 0.0
    %178 = vmatpush1.msra.mxu0 0.0
    %179 = vmatprep.subr.mxu0 0.0
    %180 = vmatpush1.msra.mxu0 0.0
    %181 = vmatprep.subr.mxu0 0.0
    %182 = vmatpush1.msra.mxu0 0.0
    %183 = vmatprep.subr.mxu0 0.0
    %184 = vmatpush1.msra.mxu0 0.0
    %185 = vmatprep.subr.mxu0 0.0
    %186 = vmatpush1.msra.mxu0 0.0
    %187 = vmatprep.subr.mxu0 0.0
    %188 = vmatpush1.msra.mxu0 0.0
    %189 = vmatprep.subr.mxu0 0.0
    %190 = vmatpush1.msra.mxu0 0.0
    %191 = vmatprep.subr.mxu0 0.0
    %192 = vmatpush1.msra.mxu0 0.0
    %193 = vmatprep.subr.mxu0 0.0
    %194 = vmatpush1.msra.mxu0 0.0
    %195 = vmatprep.subr.mxu0 0.0
    %196 = vmatpush1.msra.mxu0 0.0
    %197 = vmatprep.subr.mxu0 0.0
    %198 = vmatpush1.msra.mxu0 0.0
    %199 = vmatprep.subr.mxu0 0.0
    %200 = vmatpush1.msra.mxu0 0.0
    %201 = vmatprep.subr.mxu0 0.0
    %202 = vmatpush1.msra.mxu0 0.0
    %203 = vmatprep.subr.mxu0 0.0
    %204 = vmatpush1.msra.mxu0 0.0
    %205 = vmatprep.subr.mxu0 0.0
    %206 = vmatpush1.msra.mxu0 0.0
    %207 = vmatprep.subr.mxu0 0.0
    %208 = vmatpush1.msra.mxu0 0.0
    %209 = vmatprep.subr.mxu0 0.0
    %210 = vmatpush1.msra.mxu0 0.0
    %211 = vmatprep.subr.mxu0 0.0
    %212 = vmatpush1.msra.mxu0 0.0
    %213 = vmatprep.subr.mxu0 0.0
    %214 = vmatpush1.msra.mxu0 0.0
    %215 = vmatprep.subr.mxu0 0.0
    %216 = vmatpush1.msra.mxu0 0.0
    %217 = vmatprep.subr.mxu0 0.0
    %218 = vmatpush1.msra.mxu0 0.0
    %219 = vmatprep.subr.mxu0 0.0
    %220 = vmatpush1.msra.mxu0 0.0
    %221 = vmatprep.subr.mxu0 0.0
    %222 = vmatpush1.msra.mxu0 0.0
    %223 = vmatprep.subr.mxu0 0.0
    %224 = vmatpush1.msra.mxu0 0.0
    %225 = vmatprep.subr.mxu0 0.0
    %226 = vmatpush1.msra.mxu0 0.0
    %227 = vmatprep.mubr.f32.mxu0 0.0
    %228 = vmatmul.mubr.f32.gmra.mrb[0].mxu0 %v161
    %v229 = vpop.f32.mrb[0].mxu0
    %v230 = vadd.f32 %v142, %v229
    %v231 = vpop.f32.mrb[0].mxu0
    %232 = vdwg.mxu0
    %v235 = vunpack.c.l.s4 1966171168
    %v236 = vunpack.c.0.s8 %v235
    %v237 = vlaneseq
    %v238 = vshrl.u32 %v237, 7
    %v239 = vsub.s32 %v236, %v238
    %v240 = vrot.slane %v230, %v239
    %v241 = vcombine.high %v240, %v240
    %v243 = vunpack.c.l.s4 1966171168
    %v244 = vunpack.c.0.s8 %v243
    %v245 = vlaneseq
    %v246 = vshrl.u32 %v245, 7
    %v247 = vsub.s32 %v244, %v246
    %v248 = vrot.slane %v240, %v247
    %v250 = vunpack.c.l.s4 1966171168
    %v251 = vunpack.c.0.s8 %v250
    %v252 = vlaneseq
    %v253 = vshrl.u32 %v252, 7
    %v254 = vsub.s32 %v251, %v253
    %v255 = vrot.slane %v241, %v254
    %vm258 = vcmask 253952
    %259 = vst.msk [vmem:[#allocation4] sm:$0x1] %vm258, %v248
    %260 = vst.msk [vmem:[#allocation4 + $0x1] sm:$0x1] %vm258, %v255
    // Predicated region
    $region26: #{tpu_custom_call.1} parent=1 // pred_check
      _
    $region27: #{tpu_custom_call.1} parent=1 // pred_check_branch
      %262 = sbr.rel (0) target = $region29
    $region28: #{tpu_custom_call.1} parent=1 // pred_region
      %s264 = ssub.s32 256, 256
      %265 = vsyncadd [#allocation3], %s264
      %s266 = sshll.u32 [#allocation2], 4
      %s267 = int_to_ptr.vmem [resolvable:$true] %s266
      %272 = dma.vmem_to_hbm [thread:$0]  %s267, 256, %s6, [#allocation3], 128, 128, 8
    $region29: #{tpu_custom_call.1} parent=1 // pred_fallthru
      _
    // Predicated region
    $region30: #{tpu_custom_call.1} parent=1 // pred_check
      _
    $region31: #{tpu_custom_call.1} parent=1 // pred_check_branch
      %274 = sbr.rel (0) target = $region33
    $region32: #{tpu_custom_call.1} parent=1 // pred_region
      %s276 = ssub.s32 32, 32
      %277 = vsyncadd [#allocation5], %s276
      %s278 = sshll.u32 [#allocation4], 4
      %s279 = int_to_ptr.vmem [resolvable:$true] %s278
      %284 = dma.vmem_to_hbm [thread:$0]  %s279, 32, %s7, [#allocation5], 16, 16, 1
    $region33: #{tpu_custom_call.1} parent=1 // pred_fallthru
      _
    // Predicated region
    $region34: #{tpu_custom_call.1} parent=1 // pred_check
      _
    $region35: #{tpu_custom_call.1} parent=1 // pred_check_branch
      %286 = sbr.rel (0) target = $region37
    $region36: #{tpu_custom_call.1} parent=1 // pred_region
      %287 = dma.done [#allocation3], 256
    $region37: #{tpu_custom_call.1} parent=1 // pred_fallthru
      _
    // Predicated region
    $region38: #{tpu_custom_call.1} parent=1 // pred_check
      _
    $region39: #{tpu_custom_call.1} parent=1 // pred_check_branch
      %289 = sbr.rel (0) target = $region41
    $region40: #{tpu_custom_call.1} parent=1 // pred_region
      %290 = dma.done [#allocation5], 32
    $region41: #{tpu_custom_call.1} parent=1 // pred_fallthru
      _
    %291 = vsyncpa [#allocation3], 1
    %292 = vsyncpa [#allocation5], 1

</llo_original>
